<compile_context>
chip_gen: v7x
topology: tpu7x:2x2x1
jax: 0.10.0
libtpu: 0.0.40
codegen_flags: <defaults>
</compile_context>

<pallas_src>
import functools
import math

import jax
import jax.numpy as jnp
from jax.experimental import pallas as pl
from jax.experimental.pallas import tpu as pltpu

_LANE = 128
_MAX_FOLD_LANES = 512


def _cdiv(a, b):
    return (a + b - 1) // b


def _round_up(x, m):
    return ((x + m - 1) // m) * m


def _sublane(itemsize):
    # Sub-32-bit dtypes pack along sublanes: 8 rows (f32), 16 (bf16), 32 (int8).
    return max(8, 32 // int(itemsize))


@functools.lru_cache(maxsize=None)
def _chip_config():
    """Per-generation tuning: (block_bytes, vmem_limit_bytes, parallel_cores)."""
    kind = ""
    try:
        kind = jax.devices()[0].device_kind.lower()
    except Exception:
        pass
    vmem_phys = None
    try:
        vmem_phys = int(pltpu.get_tpu_info().vmem_capacity_bytes)
    except Exception:
        pass
    looks_v7 = ("v7" in kind) or ("7x" in kind)
    if vmem_phys is None:
        vmem_phys = (64 if looks_v7 else 128) * 1024 * 1024
    if looks_v7 or vmem_phys <= 80 * 1024 * 1024:
        # v7x-class: 64 MiB physical VMEM, ~3.2 TB/s HBM, 2 TensorCores.
        # ~4 MiB tiles keep the ~0.35 us per-grid-step overhead small; 48 MiB
        # limit leaves room for 2x(in)+2x(out) pipeline buffers + f32 temps.
        return 4 * 1024 * 1024, 48 * 1024 * 1024, 2
    # v5e / v6e class: 128 MiB physical VMEM, single TensorCore per chip.
    return 4 * 1024 * 1024, 64 * 1024 * 1024, 1


def _pick_row_tile(rows, row_work_bytes, sub, block_bytes, cores):
    """Rows per block: f32-working-set byte budget, rounded to the dtype
    sublane multiple; on multi-core chips aim for an even number of near-equal
    grid steps so neither TensorCore gets a near-empty ragged tile."""
    rows_pad = _round_up(rows, sub)
    tr = max(sub, (block_bytes // max(row_work_bytes, 1)) // sub * sub)
    tr = min(tr, rows_pad)
    if cores > 1 and rows_pad > sub:
        steps = _cdiv(rows, tr)
        steps = max(steps, min(2 * cores, rows_pad // sub))
        steps = _round_up(steps, cores)
        tr = min(rows_pad, _round_up(_cdiv(rows, steps), sub))
    return tr


# ----------------------------------------------------------------------------
# Kernels
# ----------------------------------------------------------------------------

def _ln_rows_kernel(x_ref, w_ref, b_ref, o_ref, *, eps):
    # x_ref: (TR, C); normalize each row over the trailing C (lane) axis.
    # Two-pass variance (robust to large means) + fused scale/shift epilogue.
    x = x_ref[...].astype(jnp.float32)
    mean = jnp.mean(x, axis=-1, keepdims=True)
    xc = x - mean
    var = jnp.mean(xc * xc, axis=-1, keepdims=True)        # biased variance
    scale = jax.lax.rsqrt(var + eps)
    o_ref[...] = (xc * (w_ref[...] * scale) + b_ref[...]).astype(o_ref.dtype)


def _ln_folded_kernel(x_ref, s_ref, w_ref, b_ref, o_ref, *, eps, inv_c):
    # x_ref: (TR, L) where each L-lane row packs k = L // C consecutive
    # length-C channel vectors; s_ref: (L, L) bf16 0/1 block-diagonal
    # segment-sum matrix (x @ S spreads each segment's sum to all of its own
    # lanes).  Segment sums of x and x*x use an explicit hi/lo bf16 split of
    # the f32 operand (the 0/1 matrix is exact in bf16), i.e. two single-pass
    # bf16 matmuls per statistic with f32 MXU accumulation: 4 MXU passes per
    # tile instead of the 12 of the previous 2x Precision.HIGHEST version,
    # with ~f32 accuracy, so this path stays HBM-bound on all generations.
    # var = E[x^2] - mean^2 (guarded at 0) keeps the two statistics
    # independent so the matmuls pipeline back-to-back.
    x = x_ref[...].astype(jnp.float32)
    s = s_ref[...]

    def seg_sum(v):
        hi = v.astype(jnp.bfloat16)
        lo = (v - hi.astype(jnp.float32)).astype(jnp.bfloat16)
        return (jnp.dot(hi, s, preferred_element_type=jnp.float32) +
                jnp.dot(lo, s, preferred_element_type=jnp.float32))

    mean = seg_sum(x) * inv_c
    ex2 = seg_sum(x * x) * inv_c
    var = jnp.maximum(ex2 - mean * mean, 0.0)              # biased variance
    scale = jax.lax.rsqrt(var + eps)
    o_ref[...] = ((x - mean) * (w_ref[...] * scale) + b_ref[...]).astype(o_ref.dtype)


def _ln_cf_kernel(x_ref, w_ref, b_ref, o_ref, *, eps):
    # x_ref: (TN, C, TL).  channels_first: reduce over the small sublane C
    # axis while the large spatial axis stays lane-dense.  No transposes.
    x = x_ref[...].astype(jnp.float32)
    mean = jnp.mean(x, axis=1, keepdims=True)
    xc = x - mean
    var = jnp.mean(xc * xc, axis=1, keepdims=True)         # biased variance
    scale = jax.lax.rsqrt(var + eps)
    o_ref[...] = (xc * (w_ref[...] * scale) + b_ref[...]).astype(o_ref.dtype)


# ----------------------------------------------------------------------------
# Wrappers
# ----------------------------------------------------------------------------

def _layer_norm_channels_last(x, weight, bias, eps):
    orig_shape = x.shape
    c = orig_shape[-1]
    rows = 1
    for d in orig_shape[:-1]:
        rows *= d
    itemsize = jnp.dtype(x.dtype).itemsize
    sub = _sublane(itemsize)
    block_bytes, vmem_limit, cores = _chip_config()
    w32 = weight.astype(jnp.float32)
    b32 = bias.astype(jnp.float32)
    params = pltpu.CompilerParams(
        dimension_semantics=("parallel",),
        vmem_limit_bytes=vmem_limit,
    )

    # Lane folding: pack k = L // C consecutive rows into one L-lane slab with
    # L = lcm(C, 128), so loads/stores are full 128-lane vectors even when C
    # does not divide 128 (ConvNeXt C = 96, 192, ...).  Free row-major reshape.
    lane_fold = math.lcm(int(c), _LANE)
    k = lane_fold // c
    fold = (c % _LANE != 0) and (lane_fold <= _MAX_FOLD_LANES) and (rows % k == 0)

    if fold:
        L = lane_fold
        rows_f = rows // k
        x2 = x.reshape(rows_f, L)
        seg = jnp.arange(L, dtype=jnp.int32) // c
        s = (seg[:, None] == seg[None, :]).astype(jnp.bfloat16)   # exact 0/1 in bf16
        w_t = jnp.tile(w32, k).reshape(1, L)
        b_t = jnp.tile(b32, k).reshape(1, L)

        tr = _pick_row_tile(rows_f, L * 4, sub, block_bytes, cores)
        out = pl.pallas_call(
            functools.partial(_ln_folded_kernel, eps=eps, inv_c=1.0 / float(c)),
            out_shape=jax.ShapeDtypeStruct((rows_f, L), x.dtype),
            grid_spec=pltpu.PrefetchScalarGridSpec(
                num_scalar_prefetch=0,
                grid=(_cdiv(rows_f, tr),),
                in_specs=[
                    pl.BlockSpec((tr, L), lambda i: (i, 0)),
                    pl.BlockSpec((L, L), lambda i: (0, 0)),
                    pl.BlockSpec((1, L), lambda i: (0, 0)),
                    pl.BlockSpec((1, L), lambda i: (0, 0)),
                ],
                out_specs=pl.BlockSpec((tr, L), lambda i: (i, 0)),
            ),
            compiler_params=params,
        )(x2, s, w_t, b_t)
        return out.reshape(orig_shape)

    # General path (C a multiple of 128, or fold not applicable): per-row
    # cross-lane reduction.  Ragged last row tile reads garbage only into
    # padding rows whose writes are dropped.
    x2 = x.reshape(rows, c)
    w2 = w32.reshape(1, c)
    b2 = b32.reshape(1, c)
    tr = _pick_row_tile(rows, c * 4, sub, block_bytes, cores)
    out = pl.pallas_call(
        functools.partial(_ln_rows_kernel, eps=eps),
        out_shape=jax.ShapeDtypeStruct((rows, c), x.dtype),
        grid_spec=pltpu.PrefetchScalarGridSpec(
            num_scalar_prefetch=0,
            grid=(_cdiv(rows, tr),),
            in_specs=[
                pl.BlockSpec((tr, c), lambda i: (i, 0)),
                pl.BlockSpec((1, c), lambda i: (0, 0)),
                pl.BlockSpec((1, c), lambda i: (0, 0)),
            ],
            out_specs=pl.BlockSpec((tr, c), lambda i: (i, 0)),
        ),
        compiler_params=params,
    )(x2, w2, b2)
    return out.reshape(orig_shape)


def _layer_norm_channels_first(x, weight, bias, eps):
    # x: (N, C, *spatial) -> view as (N, C, HW); reduce over C inside the kernel.
    n, c = x.shape[0], x.shape[1]
    hw = 1
    for d in x.shape[2:]:
        hw *= d
    itemsize = jnp.dtype(x.dtype).itemsize
    block_bytes, vmem_limit, cores = _chip_config()
    x3 = x.reshape(n, c, hw)                       # free row-major reshape
    w3 = weight.astype(jnp.float32).reshape(1, c, 1)
    b3 = bias.astype(jnp.float32).reshape(1, c, 1)

    hw_pad = _round_up(hw, _LANE)
    if hw >= _LANE:
        # Lane (spatial) tile: multiple of 128, sized from the f32 working-set
        # byte budget, but never shorter than ~2 KiB of contiguous bytes per
        # (n, c) DMA run -- spend remaining budget on the batch tile instead.
        tl = (block_bytes // max(c * 4, 1)) // _LANE * _LANE
        run_floor = min(hw_pad, _round_up(max(_LANE, 2048 // itemsize), _LANE))
        tl = min(hw_pad, max(tl, run_floor, _LANE))
    else:
        tl = hw
    tn = max(1, min(n, block_bytes // max(c * tl * 4, 1)))
    if cores > 1:
        # v7x: make sure both TensorCores get grid steps; split batch first.
        while tn > 1 and _cdiv(n, tn) * _cdiv(hw, tl) < cores:
            tn = _cdiv(tn, 2)
        if _cdiv(n, tn) * _cdiv(hw, tl) < cores and hw >= cores * _LANE:
            tl = max(_LANE, _round_up(_cdiv(hw, cores), _LANE))

    out = pl.pallas_call(
        functools.partial(_ln_cf_kernel, eps=eps),
        out_shape=jax.ShapeDtypeStruct((n, c, hw), x.dtype),
        grid_spec=pltpu.PrefetchScalarGridSpec(
            num_scalar_prefetch=0,
            grid=(_cdiv(n, tn), _cdiv(hw, tl)),
            in_specs=[
                pl.BlockSpec((tn, c, tl), lambda i, j: (i, 0, j)),
                pl.BlockSpec((1, c, 1), lambda i, j: (0, 0, 0)),
                pl.BlockSpec((1, c, 1), lambda i, j: (0, 0, 0)),
            ],
            out_specs=pl.BlockSpec((tn, c, tl), lambda i, j: (i, 0, j)),
        ),
        compiler_params=pltpu.CompilerParams(
            dimension_semantics=("parallel", "parallel"),
            vmem_limit_bytes=vmem_limit,
        ),
    )(x3, w3, b3)
    return out.reshape(x.shape)


def layer_norm(x, weight, bias, eps=1e-6, data_format="channels_last"):
    if data_format not in ("channels_last", "channels_first"):
        raise NotImplementedError
    if data_format == "channels_first":
        return _layer_norm_channels_first(x, weight, bias, eps)
    return _layer_norm_channels_last(x, weight, bias, eps)


# ----------------------------------------------------------------------------
# Pure-JAX reference mirroring the PyTorch module
# ----------------------------------------------------------------------------

def _ref_layer_norm(x, weight, bias, eps, data_format):
    if data_format == "channels_last":
        mean = jnp.mean(x, axis=-1, keepdims=True)
        var = jnp.mean((x - mean) ** 2, axis=-1, keepdims=True)
        return (x - mean) / jnp.sqrt(var + eps) * weight + bias
    u = jnp.mean(x, axis=1, keepdims=True)
    s = jnp.mean((x - u) ** 2, axis=1, keepdims=True)
    xn = (x - u) / jnp.sqrt(s + eps)
    return weight[None, :, None, None] * xn + bias[None, :, None, None]


if __name__ == "__main__":
    key = jax.random.PRNGKey(0)
    k1, k2, k3 = jax.random.split(key, 3)
    eps = 1e-6

    # ---- channels_first: x is NCHW (2, 4, 16, 16), dim = 4 ----
    dim_cf = 4
    w_cf = jnp.ones((dim_cf,), jnp.float32)     # nn.Parameter(torch.ones(dim))
    b_cf = jnp.zeros((dim_cf,), jnp.float32)    # nn.Parameter(torch.zeros(dim))
    x_cf = jax.random.normal(k1, (2, 4, 16, 16), dtype=jnp.float32)
    y_cf = layer_norm(x_cf, w_cf, b_cf, eps, "channels_first")
    jax.block_until_ready(y_cf)
    ref_cf = _ref_layer_norm(x_cf, w_cf, b_cf, eps, "channels_first")
    assert y_cf.shape == x_cf.shape
    assert jnp.allclose(y_cf, ref_cf, atol=1e-4, rtol=1e-4)

    # ---- channels_last: x is NHWC (2, 16, 16, 32), dim = 32 (fold, L=128) ----
    dim_cl = 32
    w_cl = jnp.ones((dim_cl,), jnp.float32)
    b_cl = jnp.zeros((dim_cl,), jnp.float32)
    x_cl = jax.random.normal(k2, (2, 16, 16, 32), dtype=jnp.float32)
    y_cl = layer_norm(x_cl, w_cl, b_cl, eps, "channels_last")
    jax.block_until_ready(y_cl)
    ref_cl = _ref_layer_norm(x_cl, w_cl, b_cl, eps, "channels_last")
    assert y_cl.shape == x_cl.shape
    assert jnp.allclose(y_cl, ref_cl, atol=1e-4, rtol=1e-4)

    # ---- channels_last with C = 96 (ConvNeXt shape, generalized fold L=384) ----
    dim_96 = 96
    w_96 = jnp.ones((dim_96,), jnp.float32)
    b_96 = jnp.zeros((dim_96,), jnp.float32)
    x_96 = jax.random.normal(k3, (2, 8, 8, 96), dtype=jnp.float32)
    y_96 = layer_norm(x_96, w_96, b_96, eps, "channels_last")
    jax.block_until_ready(y_96)
    ref_96 = _ref_layer_norm(x_96, w_96, b_96, eps, "channels_last")
    assert y_96.shape == x_96.shape
    assert jnp.allclose(y_96, ref_96, atol=1e-4, rtol=1e-4)

    print("KERNEL_OK")
</pallas_src>

<mosaic_0001>
module attributes {stable_mosaic.version = 11 : i64} {
  func.func @_ln_cf_kernel(%arg0: i32, %arg1: i32, %arg2: memref<2x4x256xf32, #tpu.memory_space<vmem>>, %arg3: memref<1x4x1xf32, #tpu.memory_space<vmem>>, %arg4: memref<1x4x1xf32, #tpu.memory_space<vmem>>, %arg5: memref<2x4x256xf32, #tpu.memory_space<vmem>>) attributes {dimension_semantics = [#tpu.dimension_semantics<parallel>, #tpu.dimension_semantics<parallel>], iteration_bounds = array<i64: 1, 1>, scalar_prefetch = 0 : i64, scratch_operands = 0 : i64, tpu.core_type = #tpu.core_type<tc>, window_params = [{transform_indices = @transform_0, window_bounds = array<i64: 2, 4, 256>}, {pipeline_mode = #tpu.pipeline_mode<synchronous>, transform_indices = @transform_1, window_bounds = array<i64: 1, 4, 1>}, {pipeline_mode = #tpu.pipeline_mode<synchronous>, transform_indices = @transform_2, window_bounds = array<i64: 1, 4, 1>}, {transform_indices = @transform_3, window_bounds = array<i64: 2, 4, 256>}]} {
    %c0 = arith.constant 0 : index
    %c0_0 = arith.constant 0 : index
    %c0_1 = arith.constant 0 : index
    %0 = vector.load %arg2[%c0, %c0_0, %c0_1] : memref<2x4x256xf32, #tpu.memory_space<vmem>>, vector<2x4x256xf32>
    %cst = arith.constant dense<0.000000e+00> : vector<2x256xf32>
    %1 = vector.multi_reduction <add>, %0, %cst [1] : vector<2x4x256xf32> to vector<2x256xf32>
    %2 = vector.shape_cast %1 : vector<2x256xf32> to vector<2x1x256xf32>
    %cst_2 = arith.constant 4.000000e+00 : f32
    %3 = vector.broadcast %cst_2 : f32 to vector<2x1x256xf32>
    %4 = arith.divf %2, %3 : vector<2x1x256xf32>
    %5 = vector.broadcast %4 : vector<2x1x256xf32> to vector<2x4x256xf32>
    %6 = arith.subf %0, %5 : vector<2x4x256xf32>
    %7 = arith.mulf %6, %6 : vector<2x4x256xf32>
    %cst_3 = arith.constant dense<0.000000e+00> : vector<2x256xf32>
    %8 = vector.multi_reduction <add>, %7, %cst_3 [1] : vector<2x4x256xf32> to vector<2x256xf32>
    %9 = vector.shape_cast %8 : vector<2x256xf32> to vector<2x1x256xf32>
    %cst_4 = arith.constant 4.000000e+00 : f32
    %10 = vector.broadcast %cst_4 : f32 to vector<2x1x256xf32>
    %11 = arith.divf %9, %10 : vector<2x1x256xf32>
    %cst_5 = arith.constant 9.99999997E-7 : f32
    %12 = vector.broadcast %cst_5 : f32 to vector<2x1x256xf32>
    %13 = arith.addf %11, %12 : vector<2x1x256xf32>
    %14 = math.rsqrt %13 : vector<2x1x256xf32>
    %c0_6 = arith.constant 0 : index
    %c0_7 = arith.constant 0 : index
    %c0_8 = arith.constant 0 : index
    %15 = vector.load %arg3[%c0_6, %c0_7, %c0_8] : memref<1x4x1xf32, #tpu.memory_space<vmem>>, vector<1x4x1xf32>
    %16 = vector.broadcast %15 : vector<1x4x1xf32> to vector<2x4x256xf32>
    %17 = vector.broadcast %14 : vector<2x1x256xf32> to vector<2x4x256xf32>
    %18 = arith.mulf %16, %17 : vector<2x4x256xf32>
    %19 = arith.mulf %6, %18 : vector<2x4x256xf32>
    %c0_9 = arith.constant 0 : index
    %c0_10 = arith.constant 0 : index
    %c0_11 = arith.constant 0 : index
    %20 = vector.load %arg4[%c0_9, %c0_10, %c0_11] : memref<1x4x1xf32, #tpu.memory_space<vmem>>, vector<1x4x1xf32>
    %21 = vector.broadcast %20 : vector<1x4x1xf32> to vector<2x4x256xf32>
    %22 = arith.addf %19, %21 : vector<2x4x256xf32>
    %c0_12 = arith.constant 0 : index
    %c0_13 = arith.constant 0 : index
    %c0_14 = arith.constant 0 : index
    %23 = vector.load %arg5[%c0_12, %c0_13, %c0_14] : memref<2x4x256xf32, #tpu.memory_space<vmem>>, vector<2x4x256xf32>
    tpu.vector_store %arg5[%c0_12, %c0_13, %c0_14], %22 {strides = array<i32>} : memref<2x4x256xf32, #tpu.memory_space<vmem>>, vector<2x4x256xf32>,
    return
  }
  func.func @transform_0(%arg0: i32, %arg1: i32) -> (i32, i32, i32) {
    %c0_i32 = arith.constant 0 : i32
    %c0_i32_0 = arith.constant 0 : i32
    return %arg0, %c0_i32, %arg1 : i32, i32, i32
  }
  func.func @transform_1(%arg0: i32, %arg1: i32) -> (i32, i32, i32) {
    %c0_i32 = arith.constant 0 : i32
    %c0_i32_0 = arith.constant 0 : i32
    %c0_i32_1 = arith.constant 0 : i32
    %c0_i32_2 = arith.constant 0 : i32
    return %c0_i32, %c0_i32_0, %c0_i32_1 : i32, i32, i32
  }
  func.func @transform_2(%arg0: i32, %arg1: i32) -> (i32, i32, i32) {
    %c0_i32 = arith.constant 0 : i32
    %c0_i32_0 = arith.constant 0 : i32
    %c0_i32_1 = arith.constant 0 : i32
    %c0_i32_2 = arith.constant 0 : i32
    return %c0_i32, %c0_i32_0, %c0_i32_1 : i32, i32, i32
  }
  func.func @transform_3(%arg0: i32, %arg1: i32) -> (i32, i32, i32) {
    %c0_i32 = arith.constant 0 : i32
    %c0_i32_0 = arith.constant 0 : i32
    return %arg0, %c0_i32, %arg1 : i32, i32, i32
  }
}

</mosaic_0001>

<llo_original>
// kernel: tpu_custom_call.1
$region0: #{tpu_custom_call.1}
  #allocation0 [shape = 'u32[]', space=smem, size = 0x4, offset = 0x4, fixed_abs, tag = 'smem constant byte address 0x4 - core index']
  #allocation1 [shape = 'u32[144,128]{1,0:T(1,128)}', space=vmem, size = 0x12000, scoped, tag = 'internal scratch']
  %s0 = inlined_call_operand.hbm [shape: f32[2,4,256], index: 0, kind: input, shape index: {}]
  %s1 = inlined_call_operand.hbm [shape: f32[1,4,1], index: 1, kind: input, shape index: {}]
  %s2 = inlined_call_operand.hbm [shape: f32[1,4,1], index: 2, kind: input, shape index: {}]
  %s3 = inlined_call_operand.hbm [shape: f32[2,4,256], index: 3, kind: output, shape index: {}]
  %s4 = sld [smem:[#allocation0]]
  $region34: #{tpu_custom_call.1} parent=0
    _
  %s6 = ssub.s32 1, %s4
  %s7 = scalar_select 0, %s6, %s4
  $region1: #{tpu_custom_call.1} parent=0
    #allocation2 [shape = 'u8[8192]{0}', space=vmem, size = 0x2000, scoped, tag = 'input window, operand 0, single buffered']
    #allocation3 [shape = 's32[1]{0}', space=sflag, size = 0x4, scoped, tag = 'scoped memory for tpu_custom_call.1']
    #allocation4 [shape = 's32[1]{0}', space=sflag, size = 0x4, scoped, tag = 'scoped memory for tpu_custom_call.1']
    #allocation5 [shape = 'u8[2048]{0}', space=vmem, size = 0x800, scoped, tag = 'input window, operand 1, single buffered']
    #allocation6 [shape = 's32[1]{0}', space=sflag, size = 0x4, scoped, tag = 'scoped memory for tpu_custom_call.1']
    #allocation7 [shape = 'u8[2048]{0}', space=vmem, size = 0x800, scoped, tag = 'input window, operand 2, single buffered']
    #allocation8 [shape = 'u8[8192]{0}', space=vmem, size = 0x2000, scoped, tag = 'output window, operand 0, single buffered']
    %8 = vsyncpa [#allocation3], 0
    %9 = vsyncpa [#allocation6], 0
    %10 = vsyncpa [#allocation4], 0
    // Predicated region
    $region2: #{tpu_custom_call.1} parent=1 // pred_check
      _
    $region3: #{tpu_custom_call.1} parent=1 // pred_check_branch
      %12 = sbr.rel (0) target = $region5
    $region4: #{tpu_custom_call.1} parent=1 // pred_region
      %s14 = ssub.s32 256, 256
      %15 = vsyncadd [#allocation3], %s14
      %s16 = sshll.u32 [#allocation2], 4
      %s17 = int_to_ptr.vmem [resolvable:$true] %s16
      %22 = dma.hbm_to_vmem [thread:$0]  %s0, 256, %s17, [#allocation3], 128, 128, 8
    $region5: #{tpu_custom_call.1} parent=1 // pred_fallthru
      _
    // Predicated region
    $region6: #{tpu_custom_call.1} parent=1 // pred_check
      _
    $region7: #{tpu_custom_call.1} parent=1 // pred_check_branch
      %24 = sbr.rel (0) target = $region9
    $region8: #{tpu_custom_call.1} parent=1 // pred_region
      %s26 = ssub.s32 64, 64
      %27 = vsyncadd [#allocation6], %s26
      %s29 = sshll.u32 [#allocation5], 4
      %s30 = int_to_ptr.vmem [resolvable:$true] %s29
      %32 = dma.hbm_to_vmem [thread:$0]  %s1, 64, %s30, [#allocation6]
    $region9: #{tpu_custom_call.1} parent=1 // pred_fallthru
      _
    // Predicated region
    $region10: #{tpu_custom_call.1} parent=1 // pred_check
      _
    $region11: #{tpu_custom_call.1} parent=1 // pred_check_branch
      %34 = sbr.rel (0) target = $region13
    $region12: #{tpu_custom_call.1} parent=1 // pred_region
      %s36 = ssub.s32 64, 64
      %37 = vsyncadd [#allocation6], %s36
      %s39 = sshll.u32 [#allocation7], 4
      %s40 = int_to_ptr.vmem [resolvable:$true] %s39
      %42 = dma.hbm_to_vmem [thread:$0]  %s2, 64, %s40, [#allocation6]
    $region13: #{tpu_custom_call.1} parent=1 // pred_fallthru
      _
    // Predicated region
    $region14: #{tpu_custom_call.1} parent=1 // pred_check
      _
    $region15: #{tpu_custom_call.1} parent=1 // pred_check_branch
      %44 = sbr.rel (0) target = $region17
    $region16: #{tpu_custom_call.1} parent=1 // pred_region
      %45 = dma.done [#allocation3], 256
    $region17: #{tpu_custom_call.1} parent=1 // pred_fallthru
      _
    // Predicated region
    $region18: #{tpu_custom_call.1} parent=1 // pred_check
      _
    $region19: #{tpu_custom_call.1} parent=1 // pred_check_branch
      %47 = sbr.rel (0) target = $region21
    $region20: #{tpu_custom_call.1} parent=1 // pred_region
      %48 = dma.done [#allocation6], 64
    $region21: #{tpu_custom_call.1} parent=1 // pred_fallthru
      _
    // Predicated region
    $region22: #{tpu_custom_call.1} parent=1 // pred_check
      _
    $region23: #{tpu_custom_call.1} parent=1 // pred_check_branch
      %50 = sbr.rel (0) target = $region25
    $region24: #{tpu_custom_call.1} parent=1 // pred_region
      %51 = dma.done [#allocation6], 64
    $region25: #{tpu_custom_call.1} parent=1 // pred_fallthru
      _
    %v52 = vld [vmem:[#allocation2] sm:$0xff]
    %v53 = vld [vmem:[#allocation2 + $0x8] sm:$0xff]
    %v56 = vcombine.high %v52, %v52
    %v57 = vcombine.high %v53, %v53
    %vm60 = vcmask 1043456
    %v61 = vsel %vm60, %v52, 0.0
    %v62 = vrot.slane %v61, 4
    %v63 = vadd.f32 %v61, %v62
    %v64 = vrot.slane %v63, 2
    %v65 = vadd.f32 %v63, %v64
    %v66 = vrot.slane %v65, 1
    %v67 = vadd.f32 %v65, %v66
    %v68 = vsel %vm60, %v56, 0.0
    %v69 = vrot.slane %v68, 4
    %v70 = vadd.f32 %v68, %v69
    %v71 = vrot.slane %v70, 2
    %v72 = vadd.f32 %v70, %v71
    %v73 = vrot.slane %v72, 1
    %v74 = vadd.f32 %v72, %v73
    %v75 = vsel %vm60, %v53, 0.0
    %v76 = vrot.slane %v75, 4
    %v77 = vadd.f32 %v75, %v76
    %v78 = vrot.slane %v77, 2
    %v79 = vadd.f32 %v77, %v78
    %v80 = vrot.slane %v79, 1
    %v81 = vadd.f32 %v79, %v80
    %v82 = vsel %vm60, %v57, 0.0
    %v83 = vrot.slane %v82, 4
    %v84 = vadd.f32 %v82, %v83
    %v85 = vrot.slane %v84, 2
    %v86 = vadd.f32 %v84, %v85
    %v87 = vrot.slane %v86, 1
    %v88 = vadd.f32 %v86, %v87
    %v89 = vrcp.pop 4.0
    %v90 = vmul.f32 %v67, %v89
    %v91 = vmul.f32 %v74, %v89
    %v92 = vmul.f32 %v81, %v89
    %v93 = vmul.f32 %v88, %v89
    %v98 = vcombine.low %v90, %v91
    %v99 = vcombine.low %v92, %v93
    %v102 = vsub.f32 %v52, %v98
    %v103 = vsub.f32 %v53, %v99
    %v104 = vmul.f32 %v102, %v102
    %v105 = vmul.f32 %v103, %v103
    %v108 = vcombine.high %v104, %v104
    %v109 = vcombine.high %v105, %v105
    %v112 = vsel %vm60, %v104, 0.0
    %v113 = vrot.slane %v112, 4
    %v114 = vadd.f32 %v112, %v113
    %v115 = vrot.slane %v114, 2
    %v116 = vadd.f32 %v114, %v115
    %v117 = vrot.slane %v116, 1
    %v118 = vadd.f32 %v116, %v117
    %v119 = vsel %vm60, %v108, 0.0
    %v120 = vrot.slane %v119, 4
    %v121 = vadd.f32 %v119, %v120
    %v122 = vrot.slane %v121, 2
    %v123 = vadd.f32 %v121, %v122
    %v124 = vrot.slane %v123, 1
    %v125 = vadd.f32 %v123, %v124
    %v126 = vsel %vm60, %v105, 0.0
    %v127 = vrot.slane %v126, 4
    %v128 = vadd.f32 %v126, %v127
    %v129 = vrot.slane %v128, 2
    %v130 = vadd.f32 %v128, %v129
    %v131 = vrot.slane %v130, 1
    %v132 = vadd.f32 %v130, %v131
    %v133 = vsel %vm60, %v109, 0.0
    %v134 = vrot.slane %v133, 4
    %v135 = vadd.f32 %v133, %v134
    %v136 = vrot.slane %v135, 2
    %v137 = vadd.f32 %v135, %v136
    %v138 = vrot.slane %v137, 1
    %v139 = vadd.f32 %v137, %v138
    %v140 = vmul.f32 %v118, %v89
    %v141 = vmul.f32 %v125, %v89
    %v142 = vmul.f32 %v132, %v89
    %v143 = vmul.f32 %v139, %v89
    %v144 = vadd.f32 %v140, 1e-06
    %v145 = vadd.f32 %v141, 1e-06
    %v146 = vadd.f32 %v142, 1e-06
    %v147 = vadd.f32 %v143, 1e-06
    %v148 = vrsqrt.pop %v144
    %v149 = vrsqrt.pop %v145
    %v150 = vrsqrt.pop %v146
    %v151 = vrsqrt.pop %v147
    %v152 = vld [vmem:[#allocation5] sm:$0xf]
    %154 = vset.pattern.permute.xlu0 0
    %155 = vperm.xlu0 %154, %v152
    %v156 = vpop.permute.xlu0 %155
    %v158 = vmul.f32 %v156, %v148
    %v159 = vmul.f32 %v156, %v149
    %v160 = vmul.f32 %v156, %v150
    %v161 = vmul.f32 %v156, %v151
    %v166 = vcombine.low %v158, %v159
    %v167 = vcombine.low %v160, %v161
    %v170 = vmul.f32 %v102, %v166
    %v171 = vmul.f32 %v103, %v167
    %v172 = vld [vmem:[#allocation7] sm:$0xf]
    %174 = vset.pattern.permute.xlu0 0
    %175 = vperm.xlu0 %174, %v172
    %v176 = vpop.permute.xlu0 %175
    %v178 = vunpack.c.l.s4 839922192
    %v179 = vunpack.c.0.s8 %v178
    %v180 = vlaneseq
    %v181 = vshrl.u32 %v180, 7
    %v182 = vsub.s32 %v179, %v181
    %v183 = vrot.slane %v176, %v182
    %v185 = vadd.f32 %v170, %v183
    %v186 = vadd.f32 %v171, %v183
    %187 = vst [vmem:[#allocation8] sm:$0xff] %v185
    %188 = vst [vmem:[#allocation8 + $0x8] sm:$0xff] %v186
    // Predicated region
    $region26: #{tpu_custom_call.1} parent=1 // pred_check
      _
    $region27: #{tpu_custom_call.1} parent=1 // pred_check_branch
      %190 = sbr.rel (0) target = $region29
    $region28: #{tpu_custom_call.1} parent=1 // pred_region
      %s192 = ssub.s32 256, 256
      %193 = vsyncadd [#allocation4], %s192
      %s194 = sshll.u32 [#allocation8], 4
      %s195 = int_to_ptr.vmem [resolvable:$true] %s194
      %200 = dma.vmem_to_hbm [thread:$0]  %s195, 256, %s3, [#allocation4], 128, 128, 8
    $region29: #{tpu_custom_call.1} parent=1 // pred_fallthru
      _
    // Predicated region
    $region30: #{tpu_custom_call.1} parent=1 // pred_check
      _
    $region31: #{tpu_custom_call.1} parent=1 // pred_check_branch
      %202 = sbr.rel (0) target = $region33
    $region32: #{tpu_custom_call.1} parent=1 // pred_region
      %203 = dma.done [#allocation4], 256
    $region33: #{tpu_custom_call.1} parent=1 // pred_fallthru
      _
    %204 = vsyncpa [#allocation3], 1
    %205 = vsyncpa [#allocation6], 1
    %206 = vsyncpa [#allocation4], 1

</llo_original>
